<compile_context>
chip_gen: v6e
topology: v6e:2x2x1
jax: 0.10.0
libtpu: 0.0.40
codegen_flags: <defaults>
</compile_context>

<pallas_src>
import jax
import jax.numpy as jnp
from jax.experimental import pallas as pl
from jax.experimental.pallas import tpu as pltpu


# ---------------------------------------------------------------------------
# helpers
# ---------------------------------------------------------------------------

def _round_up(n, m):
    return ((n + m - 1) // m) * m


def _pick_tile(batch, max_tile=512, min_steps=2):
    """Pad the batch to a multiple of 128 and pick a lane tile.

    The tile is a multiple-of-128 divisor of the padded batch, at most
    `max_tile`, preferring >= `min_steps` grid steps (v7x has 2 TensorCores
    and the batch grid axis is marked "parallel")."""
    b_pad = _round_up(max(int(batch), 1), 128)
    divisors = [d for d in range(128, b_pad + 1, 128) if b_pad % d == 0]
    good = [d for d in divisors if d <= max_tile and b_pad // d >= min_steps]
    if good:
        tile = max(good)
    else:
        ok = [d for d in divisors if d <= max_tile]
        tile = max(ok) if ok else divisors[0]
    return tile, b_pad


def _pad_lanes(a, b_pad):
    """Zero-pad the trailing (batch) axis of a column-layout array."""
    b = a.shape[-1]
    if b == b_pad:
        return a
    pad = [(0, 0)] * (a.ndim - 1) + [(0, b_pad - b)]
    return jnp.pad(a, pad)


# ---------------------------------------------------------------------------
# Pallas kernels (all batch-on-lanes)
# ---------------------------------------------------------------------------

def _gmf_kernel(u_ref, i_ref, w_ref, o_ref):
    # GMFBase head: elementwise product + bias-free Linear(E, 1) contracted
    # on the MXU.  (E, TB) columns -> lane-dense (1, TB) score row.
    o_ref[...] = jnp.dot(w_ref[...], u_ref[...] * i_ref[...],
                         preferred_element_type=jnp.float32)


def _map_gmf_kernel(u_ref, mw_ref, i_ref, w_ref, o_ref):
    # test_map: mapping Linear fused with the GMF head (mapped user embedding
    # never leaves VMEM).
    um = jnp.dot(mw_ref[...], u_ref[...], preferred_element_type=jnp.float32)
    o_ref[...] = jnp.dot(w_ref[...], um * i_ref[...],
                         preferred_element_type=jnp.float32)


def _map_emb_kernel(x_ref, mw_ref, o_ref):
    # train_map: mapping Linear, batch on lanes (lane-dense (E, TB) output).
    o_ref[...] = jnp.dot(mw_ref[...], x_ref[...],
                         preferred_element_type=jnp.float32)


def _fused_pre_kernel(ufea_ref, mask_ref, uid_ref, iid_ref,
                      w1_ref, b1_ref, w2_ref,
                      wd1_ref, bd1_ref, wd2_ref, bd2_ref,
                      gw_ref, rep_ref, sel_ref, o_ref):
    """Fused MetaNet + bmm(uid, mapping) + GMF head, batch on lanes.

    ufea_ref : (S, E, TILE_B) history item embeddings (feature on sublanes)
    mask_ref : (S, TILE_B)    1.0 where the history item id == 0 (padding)
    uid_ref  : (E, TILE_B)    source-domain user embedding
    iid_ref  : (E, TILE_B)    target-domain item embedding
    o_ref    : (1, TILE_B)    lane-dense score row
    Weights are passed out-major so every matmul keeps batch on lanes
    (N = TILE_B on the MXU); the per-row (E, E) mapping stays in VMEM.
    """
    S = ufea_ref.shape[0]
    w1 = w1_ref[...]                      # (E, E)  event_K layer 1 (out, in)
    b1 = b1_ref[...]                      # (E, 1)
    w2 = w2_ref[...]                      # (1, E)  event_K layer 2

    # ---- MetaNet.event_K: one small MXU matmul pair per history position,
    # each with N = TILE_B; the (1, TILE_B) scores are packed once into a
    # dense (S, TILE_B) tile (no one-hot masks, no wide accumulator).
    ek_rows = []
    for s in range(S):
        u_s = ufea_ref[s]                                          # (E, TB)
        h_s = jnp.maximum(
            jnp.dot(w1, u_s, preferred_element_type=jnp.float32) + b1, 0.0)
        ek_rows.append(
            jnp.dot(w2, h_s, preferred_element_type=jnp.float32))  # (1, TB)
    ek = jnp.concatenate(ek_rows, axis=0)                          # (S, TB)

    # ---- masked softmax over the history axis (cheap sublane reduce) -------
    t = ek - mask_ref[...] * 1e8
    m = jnp.max(t, axis=0, keepdims=True)
    p = jnp.exp(t - m)
    att = p / jnp.sum(p, axis=0, keepdims=True)                    # (S, TB)

    # ---- attention-weighted history embedding: S sublane-broadcast FMAs ----
    his = att[0:1, :] * ufea_ref[0]                                # (E, TB)
    for s in range(1, S):
        his = his + att[s:s + 1, :] * ufea_ref[s]

    # ---- MetaNet.decoder -> per-row flattened (E, E) mapping (VMEM only) ---
    d = jnp.maximum(
        jnp.dot(wd1_ref[...], his, preferred_element_type=jnp.float32)
        + bd1_ref[...], 0.0)                                       # (M, TB)
    mf = (jnp.dot(wd2_ref[...], d, preferred_element_type=jnp.float32)
          + bd2_ref[...])                                          # (E*E, TB)

    # ---- bmm(uid, mapping) via two constant 0/1 matmuls (no reshape):
    #   rep[e*E+o, e] = 1  ->  uid_exp    = rep @ uid              (E*E, TB)
    #   sel[o, e*E+o] = 1  ->  uid_mapped = sel @ (uid_exp * mf)   (E, TB)
    uid_exp = jnp.dot(rep_ref[...], uid_ref[...],
                      preferred_element_type=jnp.float32)
    uid_mapped = jnp.dot(sel_ref[...], uid_exp * mf,
                         preferred_element_type=jnp.float32)

    # ---- GMF head: elementwise product + MXU-contracted Linear(E, 1) -------
    o_ref[...] = jnp.dot(gw_ref[...], uid_mapped * iid_ref[...],
                         preferred_element_type=jnp.float32)       # (1, TB)


# ---------------------------------------------------------------------------
# Kernel wrappers
# ---------------------------------------------------------------------------

def gmf_score(uid_col, iid_col, w_row, *, max_tile=512):
    """uid_col, iid_col: (E, B) f32 columns;  w_row: (1, E)  ->  (B,) f32."""
    E, B = uid_col.shape
    tile, b_pad = _pick_tile(B, max_tile)
    uid_col = _pad_lanes(uid_col, b_pad)
    iid_col = _pad_lanes(iid_col, b_pad)
    out = pl.pallas_call(
        _gmf_kernel,
        out_shape=jax.ShapeDtypeStruct((1, b_pad), jnp.float32),
        grid=(b_pad // tile,),
        in_specs=[
            pl.BlockSpec((E, tile), lambda i: (0, i)),
            pl.BlockSpec((E, tile), lambda i: (0, i)),
            pl.BlockSpec((1, E), lambda i: (0, 0)),
        ],
        out_specs=pl.BlockSpec((1, tile), lambda i: (0, i)),
        compiler_params=pltpu.CompilerParams(
            dimension_semantics=("parallel",)),
    )(uid_col, iid_col, w_row)
    return out[0, :B]


def map_gmf_score(uid_col, map_w_t, iid_col, w_row, *, max_tile=512):
    """test_map: mapping(uid) fused with the GMF head."""
    E, B = uid_col.shape
    tile, b_pad = _pick_tile(B, max_tile)
    uid_col = _pad_lanes(uid_col, b_pad)
    iid_col = _pad_lanes(iid_col, b_pad)
    out = pl.pallas_call(
        _map_gmf_kernel,
        out_shape=jax.ShapeDtypeStruct((1, b_pad), jnp.float32),
        grid=(b_pad // tile,),
        in_specs=[
            pl.BlockSpec((E, tile), lambda i: (0, i)),
            pl.BlockSpec((E, E), lambda i: (0, 0)),
            pl.BlockSpec((E, tile), lambda i: (0, i)),
            pl.BlockSpec((1, E), lambda i: (0, 0)),
        ],
        out_specs=pl.BlockSpec((1, tile), lambda i: (0, i)),
        compiler_params=pltpu.CompilerParams(
            dimension_semantics=("parallel",)),
    )(uid_col, map_w_t, iid_col, w_row)
    return out[0, :B]


def map_embedding(x_col, map_w_t, *, max_tile=512):
    """train_map: x_col (E, B) -> mapping(x) as (B, E)."""
    E, B = x_col.shape
    tile, b_pad = _pick_tile(B, max_tile)
    x_col = _pad_lanes(x_col, b_pad)
    out = pl.pallas_call(
        _map_emb_kernel,
        out_shape=jax.ShapeDtypeStruct((E, b_pad), jnp.float32),
        grid=(b_pad // tile,),
        in_specs=[
            pl.BlockSpec((E, tile), lambda i: (0, i)),
            pl.BlockSpec((E, E), lambda i: (0, 0)),
        ],
        out_specs=pl.BlockSpec((E, tile), lambda i: (0, i)),
        compiler_params=pltpu.CompilerParams(
            dimension_semantics=("parallel",)),
    )(x_col, map_w_t)
    return out[:, :B].T


def premap_gmf_forward(params, x, emb_dim, *, max_tile=512):
    """test_pre / train_pre: x int32 (B, 2 + S) -> scores (B,)."""
    E = emb_dim
    B = x.shape[0]
    S = x.shape[1] - 2
    M = params['meta_wd1'].shape[1]
    tile, b_pad = _pick_tile(B, max_tile)
    if b_pad != B:
        x = jnp.pad(x, ((0, b_pad - B), (0, 0)))     # pad rows: uid=iid=seq=0
    uid = params['src_uid'][x[:, 0]].T               # (E, B_pad)
    iid = params['tgt_iid'][x[:, 1]].T               # (E, B_pad)
    seq = x[:, 2:]                                   # (B_pad, S)
    # History embeddings gathered as (S, E, B_pad): feature on sublanes, batch
    # on lanes, so each kernel DMA row is TILE_B*4 bytes of real data.
    # TODO(synk): move this gather into the kernel (scalar-prefetched seq +
    # manual DMA, or a VMEM-resident src_iid table) to kill the HBM round trip
    # of the gathered tensor.
    ufea = jnp.transpose(params['src_iid'][seq], (1, 2, 0))   # (S, E, B_pad)
    mask = (seq == 0).astype(jnp.float32).T                   # (S, B_pad)

    # out-major weights so every kernel matmul keeps batch on lanes
    w1t = params['meta_w1'].T
    b1c = params['meta_b1'].reshape(E, 1)
    w2r = params['meta_w2'].T
    wd1t = params['meta_wd1'].T
    bd1c = params['meta_bd1'].reshape(M, 1)
    wd2t = params['meta_wd2'].T
    bd2c = params['meta_bd2'].reshape(E * E, 1)

    out = pl.pallas_call(
        _fused_pre_kernel,
        out_shape=jax.ShapeDtypeStruct((1, b_pad), jnp.float32),
        grid=(b_pad // tile,),
        in_specs=[
            pl.BlockSpec((S, E, tile), lambda i: (0, 0, i)),   # ufea
            pl.BlockSpec((S, tile), lambda i: (0, i)),         # mask
            pl.BlockSpec((E, tile), lambda i: (0, i)),         # uid
            pl.BlockSpec((E, tile), lambda i: (0, i)),         # iid
            pl.BlockSpec((E, E), lambda i: (0, 0)),            # event_K W1^T
            pl.BlockSpec((E, 1), lambda i: (0, 0)),            # event_K b1
            pl.BlockSpec((1, E), lambda i: (0, 0)),            # event_K W2^T
            pl.BlockSpec((M, E), lambda i: (0, 0)),            # decoder W1^T
            pl.BlockSpec((M, 1), lambda i: (0, 0)),            # decoder b1
            pl.BlockSpec((E * E, M), lambda i: (0, 0)),        # decoder W2^T
            pl.BlockSpec((E * E, 1), lambda i: (0, 0)),        # decoder b2
            pl.BlockSpec((1, E), lambda i: (0, 0)),            # tgt GMF weight
            pl.BlockSpec((E * E, E), lambda i: (0, 0)),        # bilin rep
            pl.BlockSpec((E, E * E), lambda i: (0, 0)),        # bilin sel
        ],
        out_specs=pl.BlockSpec((1, tile), lambda i: (0, i)),
        compiler_params=pltpu.CompilerParams(
            dimension_semantics=("parallel",)),
    )(ufea, mask, uid, iid,
      w1t, b1c, w2r, wd1t, bd1c, wd2t, bd2c,
      params['tgt_w'], params['bilin_rep'], params['bilin_sel'])
    return out[0, :B]


# ---------------------------------------------------------------------------
# Model wrapper (glue: embedding gathers, padding, stage dispatch)
# ---------------------------------------------------------------------------

def init_params(key, uid_all, iid_all, emb_dim, meta_dim):
    E, M = emb_dim, meta_dim
    ks = jax.random.split(key, 17)

    def n(k, shape, scale):
        return jax.random.normal(k, shape, jnp.float32) * scale

    eye = jnp.eye(E, dtype=jnp.float32)
    return {
        # embeddings (uid_all x E) / (iid_all+1 x E), per sub-model
        # TODO(synk): store embedding tables in bfloat16 (halves the dominant
        # HBM gather traffic) once the 1e-3 tolerance is re-validated.
        'src_uid': n(ks[0], (uid_all, E), 1.0),
        'src_iid': n(ks[1], (iid_all + 1, E), 1.0),
        'tgt_uid': n(ks[2], (uid_all, E), 1.0),
        'tgt_iid': n(ks[3], (iid_all + 1, E), 1.0),
        'aug_uid': n(ks[4], (uid_all, E), 1.0),
        'aug_iid': n(ks[5], (iid_all + 1, E), 1.0),
        # GMF heads: Linear(E, 1, bias=False) stored as (1, E) row vectors
        'src_w': n(ks[6], (1, E), 0.1),
        'tgt_w': n(ks[7], (1, E), 0.1),
        'aug_w': n(ks[8], (1, E), 0.1),
        # MetaNet.event_K: Linear(E,E) + bias, Linear(E,1,no bias)  (in, out)
        'meta_w1': n(ks[9], (E, E), 0.1),
        'meta_b1': n(ks[10], (1, E), 0.1),
        'meta_w2': n(ks[11], (E, 1), 0.1),
        # MetaNet.decoder: Linear(E,M)+b, Linear(M,E*E)+b  (in, out)
        'meta_wd1': n(ks[12], (E, M), 0.1),
        'meta_bd1': n(ks[13], (1, M), 0.1),
        'meta_wd2': n(ks[14], (M, E * E), 0.1),
        'meta_bd2': n(ks[15], (1, E * E), 0.1),
        # mapping: Linear(E, E, bias=False)  (in, out)
        'map_w': n(ks[16], (E, E), 0.1),
        # constant 0/1 matrices for the in-kernel bilinear bmm(uid, mapping);
        # built once here instead of per forward call:
        'bilin_rep': jnp.kron(eye, jnp.ones((E, 1), jnp.float32)),   # (E*E, E)
        'bilin_sel': jnp.kron(jnp.ones((1, E), jnp.float32), eye),   # (E, E*E)
    }


def gmf_based_model_forward(params, x, stage, emb_dim):
    if stage == 'train_src':
        return gmf_score(params['src_uid'][x[:, 0]].T,
                         params['src_iid'][x[:, 1]].T, params['src_w'])
    elif stage in ('train_tgt', 'test_tgt'):
        return gmf_score(params['tgt_uid'][x[:, 0]].T,
                         params['tgt_iid'][x[:, 1]].T, params['tgt_w'])
    elif stage in ('train_aug', 'test_aug'):
        return gmf_score(params['aug_uid'][x[:, 0]].T,
                         params['aug_iid'][x[:, 1]].T, params['aug_w'])
    elif stage in ('test_pre', 'train_pre'):
        return premap_gmf_forward(params, x, emb_dim)
    elif stage in ('train_meta', 'test_meta'):
        # TODO(synk): Fusion path requires nn.GRU + training-mode BatchNorm1d +
        # Dropout RNG (non-deterministic); no clean Pallas equivalent here.
        raise NotImplementedError("train_meta/test_meta stage not implemented")
    elif stage == 'train_map':
        src_emb = map_embedding(params['src_uid'][x].T, params['map_w'].T)
        tgt_emb = params['tgt_uid'][x]
        return src_emb, tgt_emb
    elif stage == 'test_map':
        return map_gmf_score(params['src_uid'][x[:, 0]].T, params['map_w'].T,
                             params['tgt_iid'][x[:, 1]].T, params['tgt_w'])
    else:
        raise ValueError(stage)


# ---------------------------------------------------------------------------
# Pure-JAX references (for correctness checking)
# ---------------------------------------------------------------------------

def ref_forward(params, x, stage, E):
    if stage == 'train_src':
        u = params['src_uid'][x[:, 0]]
        i = params['src_iid'][x[:, 1]]
        return (u * i) @ params['src_w'][0]
    if stage == 'test_tgt':
        u = params['tgt_uid'][x[:, 0]]
        i = params['tgt_iid'][x[:, 1]]
        return (u * i) @ params['tgt_w'][0]
    if stage == 'test_pre':
        iid = params['tgt_iid'][x[:, 1]]
        uid = params['src_uid'][x[:, 0]]
        seq = x[:, 2:]
        ufea = params['src_iid'][seq]
        mask = (seq == 0).astype(jnp.float32)
        h = jax.nn.relu(ufea @ params['meta_w1'] + params['meta_b1'][0])
        ek = (h @ params['meta_w2'])[..., 0]
        att = jax.nn.softmax(ek - mask * 1e8, axis=1)
        his = jnp.sum(att[..., None] * ufea, axis=1)
        d = jax.nn.relu(his @ params['meta_wd1'] + params['meta_bd1'][0])
        mp = (d @ params['meta_wd2'] + params['meta_bd2'][0]).reshape(-1, E, E)
        uid2 = jnp.einsum('be,beo->bo', uid, mp)
        return (uid2 * iid) @ params['tgt_w'][0]
    if stage == 'test_map':
        u = params['src_uid'][x[:, 0]] @ params['map_w']
        i = params['tgt_iid'][x[:, 1]]
        return (u * i) @ params['tgt_w'][0]
    raise ValueError(stage)


# ---------------------------------------------------------------------------
# Demo
# ---------------------------------------------------------------------------

if __name__ == "__main__":
    UID_ALL, IID_ALL = 32, 64
    EMB_DIM, META_DIM = 10, 16
    SEQ_LEN, BATCH = 20, 8

    key = jax.random.PRNGKey(0)
    kp, k0, k1, k2, k3 = jax.random.split(key, 5)
    params = init_params(kp, UID_ALL, IID_ALL, EMB_DIM, META_DIM)

    uid = jax.random.randint(k0, (BATCH, 1), 0, UID_ALL, dtype=jnp.int32)
    iid = jax.random.randint(k1, (BATCH, 1), 0, IID_ALL + 1, dtype=jnp.int32)
    hist = jax.random.randint(k2, (BATCH, SEQ_LEN), 0, IID_ALL + 1,
                              dtype=jnp.int32)
    keep = jax.random.uniform(k3, (BATCH, SEQ_LEN)) > 0.3
    hist = jnp.where(keep, hist, 0)                     # zeros exercise the mask
    x = jnp.concatenate([uid, iid, hist], axis=1)       # (B, 2 + S) int32

    out_src = jax.block_until_ready(
        gmf_based_model_forward(params, x, 'train_src', EMB_DIM))
    out_tgt = jax.block_until_ready(
        gmf_based_model_forward(params, x, 'test_tgt', EMB_DIM))
    out_pre = jax.block_until_ready(
        gmf_based_model_forward(params, x, 'test_pre', EMB_DIM))
    out_map = jax.block_until_ready(
        gmf_based_model_forward(params, x, 'test_map', EMB_DIM))
    src_e, tgt_e = gmf_based_model_forward(params, x[:, 0], 'train_map', EMB_DIM)
    jax.block_until_ready((src_e, tgt_e))

    # correctness vs pure-JAX references
    assert out_src.shape == (BATCH,)
    assert out_tgt.shape == (BATCH,)
    assert out_pre.shape == (BATCH,)
    assert out_map.shape == (BATCH,)
    assert src_e.shape == (BATCH, EMB_DIM) and tgt_e.shape == (BATCH, EMB_DIM)
    assert jnp.allclose(out_src, ref_forward(params, x, 'train_src', EMB_DIM),
                        rtol=1e-3, atol=1e-3)
    assert jnp.allclose(out_tgt, ref_forward(params, x, 'test_tgt', EMB_DIM),
                        rtol=1e-3, atol=1e-3)
    assert jnp.allclose(out_pre, ref_forward(params, x, 'test_pre', EMB_DIM),
                        rtol=1e-3, atol=1e-3)
    assert jnp.allclose(out_map, ref_forward(params, x, 'test_map', EMB_DIM),
                        rtol=1e-3, atol=1e-3)
    assert jnp.allclose(src_e, params['src_uid'][x[:, 0]] @ params['map_w'],
                        rtol=1e-3, atol=1e-3)
    assert jnp.allclose(tgt_e, params['tgt_uid'][x[:, 0]],
                        rtol=1e-3, atol=1e-3)

    print("KERNEL_OK")
</pallas_src>

<mosaic_0001>
module attributes {stable_mosaic.version = 11 : i64} {
  func.func @_gmf_kernel(%arg0: i32, %arg1: memref<10x128xf32, #tpu.memory_space<vmem>>, %arg2: memref<10x128xf32, #tpu.memory_space<vmem>>, %arg3: memref<1x10xf32, #tpu.memory_space<vmem>>, %arg4: memref<1x128xf32, #tpu.memory_space<vmem>>) attributes {dimension_semantics = [#tpu.dimension_semantics<parallel>], iteration_bounds = array<i64: 1>, scalar_prefetch = 0 : i64, scratch_operands = 0 : i64, tpu.core_type = #tpu.core_type<tc>, window_params = [{transform_indices = @transform_0, window_bounds = array<i64: 10, 128>}, {transform_indices = @transform_1, window_bounds = array<i64: 10, 128>}, {pipeline_mode = #tpu.pipeline_mode<synchronous>, transform_indices = @transform_2, window_bounds = array<i64: 1, 10>}, {transform_indices = @transform_3, window_bounds = array<i64: 1, 128>}]} {
    %c0 = arith.constant 0 : index
    %c0_0 = arith.constant 0 : index
    %0 = vector.load %arg3[%c0, %c0_0] : memref<1x10xf32, #tpu.memory_space<vmem>>, vector<1x10xf32>
    %c0_1 = arith.constant 0 : index
    %c0_2 = arith.constant 0 : index
    %1 = vector.load %arg1[%c0_1, %c0_2] : memref<10x128xf32, #tpu.memory_space<vmem>>, vector<10x128xf32>
    %c0_3 = arith.constant 0 : index
    %c0_4 = arith.constant 0 : index
    %2 = vector.load %arg2[%c0_3, %c0_4] : memref<10x128xf32, #tpu.memory_space<vmem>>, vector<10x128xf32>
    %3 = arith.mulf %1, %2 : vector<10x128xf32>
    %cst = arith.constant dense<0.000000e+00> : vector<1x128xf32>
    %4 = tpu.matmul %0, %3, %cst {dimension_numbers = #tpu.dot_dimension_numbers<[1], [0], [0], [1], [0, 0, 1, 1], [], []>} : vector<1x10xf32>, vector<10x128xf32>, vector<1x128xf32> -> vector<1x128xf32>
    %c0_5 = arith.constant 0 : index
    %c0_6 = arith.constant 0 : index
    %5 = vector.load %arg4[%c0_5, %c0_6] : memref<1x128xf32, #tpu.memory_space<vmem>>, vector<1x128xf32>
    tpu.vector_store %arg4[%c0_5, %c0_6], %4 {strides = array<i32>} : memref<1x128xf32, #tpu.memory_space<vmem>>, vector<1x128xf32>,
    return
  }
  func.func @transform_0(%arg0: i32) -> (i32, i32) {
    %c0_i32 = arith.constant 0 : i32
    %c0_i32_0 = arith.constant 0 : i32
    return %c0_i32, %arg0 : i32, i32
  }
  func.func @transform_1(%arg0: i32) -> (i32, i32) {
    %c0_i32 = arith.constant 0 : i32
    %c0_i32_0 = arith.constant 0 : i32
    return %c0_i32, %arg0 : i32, i32
  }
  func.func @transform_2(%arg0: i32) -> (i32, i32) {
    %c0_i32 = arith.constant 0 : i32
    %c0_i32_0 = arith.constant 0 : i32
    %c0_i32_1 = arith.constant 0 : i32
    return %c0_i32, %c0_i32_0 : i32, i32
  }
  func.func @transform_3(%arg0: i32) -> (i32, i32) {
    %c0_i32 = arith.constant 0 : i32
    %c0_i32_0 = arith.constant 0 : i32
    return %c0_i32, %arg0 : i32, i32
  }
}

</mosaic_0001>

<llo_original>
// kernel: tpu_custom_call.1
$region0: #{tpu_custom_call.1}
  #allocation0 [shape = 'u32[]', space=smem, size = 0x4, offset = 0x4, fixed_abs, tag = 'smem constant byte address 0x4 - core index']
  #allocation1 [shape = 'u32[144,128]{1,0:T(1,128)}', space=vmem, size = 0x12000, scoped, tag = 'internal scratch']
  %s0 = inlined_call_operand.hbm [shape: f32[10,128], index: 0, kind: input, shape index: {}]
  %s1 = inlined_call_operand.hbm [shape: f32[10,128], index: 1, kind: input, shape index: {}]
  %s2 = inlined_call_operand.vmem [shape: f32[1,10], index: 2, kind: input, shape index: {}]
  %s3 = inlined_call_operand.hbm [shape: f32[1,128], index: 3, kind: output, shape index: {}]
  %s4 = sld [smem:[#allocation0]]
  $region30: #{tpu_custom_call.1} parent=0
    _
  %s6 = ssub.s32 1, %s4
  %s7 = scalar_select 0, %s6, %s4
  $region1: #{tpu_custom_call.1} parent=0
    #allocation2 [shape = 'u8[8192]{0}', space=vmem, size = 0x2000, scoped, tag = 'input window, operand 0, single buffered']
    #allocation3 [shape = 's32[1]{0}', space=sflag, size = 0x4, scoped, tag = 'scoped memory for tpu_custom_call.1']
    #allocation4 [shape = 's32[1]{0}', space=sflag, size = 0x4, scoped, tag = 'scoped memory for tpu_custom_call.1']
    #allocation5 [shape = 'u8[8192]{0}', space=vmem, size = 0x2000, scoped, tag = 'input window, operand 1, single buffered']
    #allocation6 [shape = 's32[1]{0}', space=sflag, size = 0x4, scoped, tag = 'scoped memory for tpu_custom_call.1']
    #allocation7 [shape = 'u8[512]{0}', space=vmem, size = 0x400, scoped, tag = 'output window, operand 0, single buffered']
    %8 = vsyncpa [#allocation3], 0
    %9 = vsyncpa [#allocation6], 0
    %10 = vsyncpa [#allocation4], 0
    // Predicated region
    $region2: #{tpu_custom_call.1} parent=1 // pred_check
      _
    $region3: #{tpu_custom_call.1} parent=1 // pred_check_branch
      %12 = sbr.rel (0) target = $region5
    $region4: #{tpu_custom_call.1} parent=1 // pred_region
      %s14 = ssub.s32 256, 256
      %15 = vsyncadd [#allocation3], %s14
      %s16 = sshll.u32 [#allocation2], 4
      %s17 = int_to_ptr.vmem [resolvable:$true] %s16
      %22 = dma.hbm_to_vmem [thread:$0]  %s0, 256, %s17, [#allocation3], 128, 128, 8
    $region5: #{tpu_custom_call.1} parent=1 // pred_fallthru
      _
    // Predicated region
    $region6: #{tpu_custom_call.1} parent=1 // pred_check
      _
    $region7: #{tpu_custom_call.1} parent=1 // pred_check_branch
      %24 = sbr.rel (0) target = $region9
    $region8: #{tpu_custom_call.1} parent=1 // pred_region
      %s26 = ssub.s32 256, 256
      %27 = vsyncadd [#allocation6], %s26
      %s28 = sshll.u32 [#allocation5], 4
      %s29 = int_to_ptr.vmem [resolvable:$true] %s28
      %34 = dma.hbm_to_vmem [thread:$0]  %s1, 256, %s29, [#allocation6], 128, 128, 8
    $region9: #{tpu_custom_call.1} parent=1 // pred_fallthru
      _
    // Predicated region
    $region10: #{tpu_custom_call.1} parent=1 // pred_check
      _
    $region11: #{tpu_custom_call.1} parent=1 // pred_check_branch
      %36 = sbr.rel (0) target = $region13
    $region12: #{tpu_custom_call.1} parent=1 // pred_region
      _
    $region13: #{tpu_custom_call.1} parent=1 // pred_fallthru
      _
    // Predicated region
    $region14: #{tpu_custom_call.1} parent=1 // pred_check
      _
    $region15: #{tpu_custom_call.1} parent=1 // pred_check_branch
      %38 = sbr.rel (0) target = $region17
    $region16: #{tpu_custom_call.1} parent=1 // pred_region
      %39 = dma.done [#allocation3], 256
    $region17: #{tpu_custom_call.1} parent=1 // pred_fallthru
      _
    // Predicated region
    $region18: #{tpu_custom_call.1} parent=1 // pred_check
      _
    $region19: #{tpu_custom_call.1} parent=1 // pred_check_branch
      %41 = sbr.rel (0) target = $region21
    $region20: #{tpu_custom_call.1} parent=1 // pred_region
      %42 = dma.done [#allocation6], 256
    $region21: #{tpu_custom_call.1} parent=1 // pred_fallthru
      _
    %v43 = vld [vmem:[%s2] sm:$0x1]
    %v44 = vld [vmem:[#allocation2] sm:$0xff]
    %v45 = vld [vmem:[#allocation2 + $0x8] sm:$0x3]
    %v46 = vld [vmem:[#allocation5] sm:$0xff]
    %v47 = vld [vmem:[#allocation5 + $0x8] sm:$0x3]
    %v48 = vmul.f32 %v44, %v46
    %v49 = vmul.f32 %v45, %v47
    %vm50 = vcmask 80896
    %v52 = vsel %vm50, %v43, 0
    %vm54 = vcmask 1041408
    %v56 = vsel %vm54, %v49, 0
    %58 = vmatprep.subr.mxu0 0.0
    %59 = vmatpush1.msra.mxu0 0.0
    %60 = vmatprep.subr.mxu0 0.0
    %61 = vmatpush1.msra.mxu0 0.0
    %62 = vmatprep.subr.mxu0 0.0
    %63 = vmatpush1.msra.mxu0 0.0
    %64 = vmatprep.subr.mxu0 0.0
    %65 = vmatpush1.msra.mxu0 0.0
    %66 = vmatprep.subr.mxu0 0.0
    %67 = vmatpush1.msra.mxu0 0.0
    %68 = vmatprep.subr.mxu0 0.0
    %69 = vmatpush1.msra.mxu0 0.0
    %70 = vmatprep.subr.mxu0 0.0
    %71 = vmatpush1.msra.mxu0 0.0
    %72 = vmatprep.subr.mxu0 0.0
    %73 = vmatpush1.msra.mxu0 0.0
    %74 = vmatprep.subr.mxu0 0.0
    %75 = vmatpush1.msra.mxu0 0.0
    %76 = vmatprep.subr.mxu0 0.0
    %77 = vmatpush1.msra.mxu0 0.0
    %78 = vmatprep.subr.mxu0 0.0
    %79 = vmatpush1.msra.mxu0 0.0
    %80 = vmatprep.subr.mxu0 0.0
    %81 = vmatpush1.msra.mxu0 0.0
    %82 = vmatprep.subr.mxu0 0.0
    %83 = vmatpush1.msra.mxu0 0.0
    %84 = vmatprep.subr.mxu0 0.0
    %85 = vmatpush1.msra.mxu0 0.0
    %86 = vmatprep.subr.mxu0 0.0
    %87 = vmatpush1.msra.mxu0 %v56
    %88 = vmatprep.subr.mxu0 0.0
    %89 = vmatpush1.msra.mxu0 %v48
    %90 = vmatprep.subr.mxu0 0.0
    %91 = vmatpush2.msra.mxu0 0.0
    %92 = vmatprep.subr.mxu0 0.0
    %93 = vmatpush2.msra.mxu0 0.0
    %94 = vmatprep.subr.mxu0 0.0
    %95 = vmatpush2.msra.mxu0 0.0
    %96 = vmatprep.subr.mxu0 0.0
    %97 = vmatpush2.msra.mxu0 0.0
    %98 = vmatprep.subr.mxu0 0.0
    %99 = vmatpush2.msra.mxu0 0.0
    %100 = vmatprep.subr.mxu0 0.0
    %101 = vmatpush2.msra.mxu0 0.0
    %102 = vmatprep.subr.mxu0 0.0
    %103 = vmatpush2.msra.mxu0 0.0
    %104 = vmatprep.subr.mxu0 0.0
    %105 = vmatpush2.msra.mxu0 0.0
    %106 = vmatprep.subr.mxu0 0.0
    %107 = vmatpush2.msra.mxu0 0.0
    %108 = vmatprep.subr.mxu0 0.0
    %109 = vmatpush2.msra.mxu0 0.0
    %110 = vmatprep.subr.mxu0 0.0
    %111 = vmatpush2.msra.mxu0 0.0
    %112 = vmatprep.subr.mxu0 0.0
    %113 = vmatpush2.msra.mxu0 0.0
    %114 = vmatprep.subr.mxu0 0.0
    %115 = vmatpush2.msra.mxu0 0.0
    %116 = vmatprep.subr.mxu0 0.0
    %117 = vmatpush2.msra.mxu0 0.0
    %118 = vmatprep.subr.mxu0 0.0
    %119 = vmatpush2.msra.mxu0 0.0
    %120 = vmatprep.subr.mxu0 0.0
    %121 = vmatpush2.msra.mxu0 0.0
    %122 = vmatprep.mubr.f32.mxu0 0.0
    %123 = vmatmul.mubr.f32.gmra.mxu0 %v52
    %v124 = vpop.f32.mrf.mxu0
    %v125 = vadd.f32 0.0, %v124
    %v126 = vpop.f32.mrf.mxu0
    %127 = vdwg.mxu0
    %128 = vst [vmem:[#allocation7] sm:$0x1] %v125
    // Predicated region
    $region22: #{tpu_custom_call.1} parent=1 // pred_check
      _
    $region23: #{tpu_custom_call.1} parent=1 // pred_check_branch
      %130 = sbr.rel (0) target = $region25
    $region24: #{tpu_custom_call.1} parent=1 // pred_region
      %s132 = ssub.s32 16, 16
      %133 = vsyncadd [#allocation4], %s132
      %s135 = sshll.u32 [#allocation7], 4
      %s136 = int_to_ptr.vmem [resolvable:$true] %s135
      %138 = dma.vmem_to_hbm [thread:$0]  %s136, 16, %s3, [#allocation4]
    $region25: #{tpu_custom_call.1} parent=1 // pred_fallthru
      _
    // Predicated region
    $region26: #{tpu_custom_call.1} parent=1 // pred_check
      _
    $region27: #{tpu_custom_call.1} parent=1 // pred_check_branch
      %140 = sbr.rel (0) target = $region29
    $region28: #{tpu_custom_call.1} parent=1 // pred_region
      %141 = dma.done [#allocation4], 16
    $region29: #{tpu_custom_call.1} parent=1 // pred_fallthru
      _
    %142 = vsyncpa [#allocation3], 1
    %143 = vsyncpa [#allocation6], 1
    %144 = vsyncpa [#allocation4], 1

</llo_original>
